<compile_context>
chip_gen: v7x
topology: tpu7x:2x2x1
jax: 0.10.0
libtpu: 0.0.40
codegen_flags: <defaults>
</compile_context>

<pallas_src>
import numpy as np

import jax
import jax.numpy as jnp
from jax import lax
from jax.experimental import pallas as pl
from jax.experimental.pallas import tpu as pltpu

EPS = 1e-5  # nn.BatchNorm2d default


# ----------------------------------------------------------------------------
# Kernel 1: conv1 (1x1) + per-tile BN1 partial statistics (sum, sum-of-squares).
# ----------------------------------------------------------------------------
def _conv1_kernel(x_ref, w1_ref, h1_ref, stat_ref):
    # x_ref: (C, Mt) bf16, w1_ref: (P, C) bf16
    h1 = jnp.dot(w1_ref[...], x_ref[...],
                 preferred_element_type=jnp.float32)            # (P, Mt) f32
    h1_ref[...] = h1.astype(jnp.bfloat16)
    s = jnp.sum(h1, axis=1, keepdims=True)                      # (P, 1)
    ss = jnp.sum(h1 * h1, axis=1, keepdims=True)                # (P, 1)
    stat_ref[...] = jnp.concatenate([s, ss], axis=1)[None]      # (1, P, 2)


# ----------------------------------------------------------------------------
# Kernel 2 factory: bn1-apply + relu, bf16 roll/mask im2col, conv2 as one
# K=9P matmul, per-tile BN2 partial statistics.  W / Mt baked in as constants.
# ----------------------------------------------------------------------------
def _make_conv2_kernel(W, Mt):
    def kernel(h1_ref, w2_ref, ab1_ref, mask_ref, y2_ref, stat_ref):
        scale = ab1_ref[:, 0:1]                                  # (P, 1) f32
        shift = ab1_ref[:, 1:2]
        h = jnp.maximum(h1_ref[...].astype(jnp.float32) * scale + shift, 0.0)
        hb = h.astype(jnp.bfloat16)                              # (P, Mt) bf16

        # 3x3 taps: lane-axis rolls (XLU slot) of hb; out-of-image taps zeroed
        # with the precomputed bf16 masks; concat on the sublane axis.
        parts = []
        k = 0
        for dy in (-1, 0, 1):
            for dx in (-1, 0, 1):
                if dy == 0 and dx == 0:
                    parts.append(hb)
                else:
                    shift_px = dy * W + dx
                    part = pltpu.roll(hb, (-shift_px) % Mt, axis=1)
                    parts.append(part * mask_ref[k:k + 1, :])
                k += 1
        slab = jnp.concatenate(parts, axis=0)                    # (9P, Mt) bf16
        # TODO(synk): on v7x, replace the materialized (9P, Mt) slab with nine
        # accumulating (P,P)x(P,Mt) matmuls in the MRB to halve VMEM per tile.
        acc = jnp.dot(w2_ref[...], slab,
                      preferred_element_type=jnp.float32)        # (P, Mt) f32

        y2_ref[...] = acc.astype(jnp.bfloat16)
        s = jnp.sum(acc, axis=1, keepdims=True)
        ss = jnp.sum(acc * acc, axis=1, keepdims=True)
        stat_ref[...] = jnp.concatenate([s, ss], axis=1)[None]

    return kernel


# ----------------------------------------------------------------------------
# Kernel 3: bn2-apply + identity residual + relu (elementwise, f32 math).
# ----------------------------------------------------------------------------
def _bn2_res_kernel(y2_ref, x_ref, ab2_ref, o_ref):
    scale = ab2_ref[:, 0:1]
    shift = ab2_ref[:, 1:2]
    out = (y2_ref[...].astype(jnp.float32) * scale + shift
           + x_ref[...].astype(jnp.float32))
    o_ref[...] = jnp.maximum(out, 0.0).astype(jnp.bfloat16)


# ----------------------------------------------------------------------------
# Wrapper helpers.
# ----------------------------------------------------------------------------
def _pick_images_per_tile(N, H, W):
    """Smallest group of whole images giving a lane-dense (%128) pixel tile."""
    hw = H * W
    for g in range(1, N + 1):
        if N % g == 0 and (g * hw) % 128 == 0:
            return g
    return N


def _make_tap_masks(G, H, W):
    """(9, G*H*W) bf16 validity masks for the 3x3 taps (1.0 = tap in-image)."""
    Mt = G * H * W
    l = np.arange(Mt)
    yy = (l // W) % H
    xx = l % W
    masks = np.zeros((9, Mt), np.float32)
    k = 0
    for dy in (-1, 0, 1):
        for dx in (-1, 0, 1):
            valid = np.ones(Mt, bool)
            if dy == -1:
                valid &= yy > 0
            elif dy == 1:
                valid &= yy < H - 1
            if dx == -1:
                valid &= xx > 0
            elif dx == 1:
                valid &= xx < W - 1
            masks[k] = valid.astype(np.float32)
            k += 1
    return jnp.asarray(masks, jnp.bfloat16)


def _finalize_bn(part_stats, count, gamma, beta):
    """Reduce per-tile (sum, sumsq) and fold BN into a per-channel FMA."""
    s = jnp.sum(part_stats, axis=0)                  # (P, 2)
    mean = s[:, 0] / count
    var = s[:, 1] / count - mean * mean
    # TODO(synk): one-pass E[x^2]-E[x]^2 variance; use Welford if |mean| >> std.
    scale = gamma * lax.rsqrt(var + EPS)
    shift = beta - mean * scale
    return jnp.stack([scale, shift], axis=1)         # (P, 2) f32


_VMEM_LIMIT = 48 * 1024 * 1024   # sized to fit v7x's 64 MiB VMEM with headroom


# ----------------------------------------------------------------------------
# Full forward: layout plumbing + three pipelined pallas_calls + BN glue.
# ----------------------------------------------------------------------------
def resnext_block_forward(x_nchw, w1_pc, w2t, g1, b1, g2, b2):
    N, C, H, W = x_nchw.shape
    P = w1_pc.shape[0]
    M = N * H * W
    G = _pick_images_per_tile(N, H, W)
    Mt = G * H * W
    n_tiles = M // Mt

    # channels on sublanes, flattened (n, h, w) pixel index on lanes; bf16 HBM.
    x_cm = jnp.transpose(x_nchw, (1, 0, 2, 3)).reshape(C, M).astype(jnp.bfloat16)
    masks = _make_tap_masks(G, H, W)

    cparams = pltpu.CompilerParams(dimension_semantics=("parallel",),
                                   vmem_limit_bytes=_VMEM_LIMIT)

    # ---- pass 1: conv1 + BN1 partial stats ---------------------------------
    h1, st1 = pl.pallas_call(
        _conv1_kernel,
        out_shape=(jax.ShapeDtypeStruct((P, M), jnp.bfloat16),
                   jax.ShapeDtypeStruct((n_tiles, P, 2), jnp.float32)),
        grid_spec=pltpu.PrefetchScalarGridSpec(
            num_scalar_prefetch=0,
            grid=(n_tiles,),
            in_specs=[
                pl.BlockSpec((C, Mt), lambda i: (0, i)),        # x tile (bf16)
                pl.BlockSpec((P, C), lambda i: (0, 0)),         # w1 (resident)
            ],
            out_specs=[
                pl.BlockSpec((P, Mt), lambda i: (0, i)),        # h1 tile (bf16)
                pl.BlockSpec((1, P, 2), lambda i: (i, 0, 0)),   # partial stats
            ]),
        compiler_params=cparams,
    )(x_cm, w1_pc)

    ab1 = _finalize_bn(st1, M, g1, b1)

    # ---- pass 2: bn1-apply + relu + grouped 3x3 conv + BN2 partial stats ---
    y2, st2 = pl.pallas_call(
        _make_conv2_kernel(W, Mt),
        out_shape=(jax.ShapeDtypeStruct((P, M), jnp.bfloat16),
                   jax.ShapeDtypeStruct((n_tiles, P, 2), jnp.float32)),
        grid_spec=pltpu.PrefetchScalarGridSpec(
            num_scalar_prefetch=0,
            grid=(n_tiles,),
            in_specs=[
                pl.BlockSpec((P, Mt), lambda i: (0, i)),        # h1 tile
                pl.BlockSpec((P, 9 * P), lambda i: (0, 0)),     # w2 (resident)
                pl.BlockSpec((P, 2), lambda i: (0, 0)),         # bn1 scale/shift
                pl.BlockSpec((9, Mt), lambda i: (0, 0)),        # tap masks
            ],
            out_specs=[
                pl.BlockSpec((P, Mt), lambda i: (0, i)),        # conv2 out tile
                pl.BlockSpec((1, P, 2), lambda i: (i, 0, 0)),   # partial stats
            ]),
        compiler_params=cparams,
    )(h1, w2t, ab1, masks)

    ab2 = _finalize_bn(st2, M, g2, b2)

    # ---- pass 3: bn2-apply + identity residual + relu ----------------------
    out_pm = pl.pallas_call(
        _bn2_res_kernel,
        out_shape=jax.ShapeDtypeStruct((P, M), jnp.bfloat16),
        grid_spec=pltpu.PrefetchScalarGridSpec(
            num_scalar_prefetch=0,
            grid=(n_tiles,),
            in_specs=[
                pl.BlockSpec((P, Mt), lambda i: (0, i)),        # conv2 out tile
                pl.BlockSpec((C, Mt), lambda i: (0, i)),        # residual tile
                pl.BlockSpec((P, 2), lambda i: (0, 0)),         # bn2 scale/shift
            ],
            out_specs=pl.BlockSpec((P, Mt), lambda i: (0, i)),
        ),
        compiler_params=cparams,
    )(y2, x_cm, ab2)

    return jnp.transpose(out_pm.reshape(P, N, H, W),
                         (1, 0, 2, 3)).astype(jnp.float32)        # NCHW f32


# ----------------------------------------------------------------------------
# Deterministic parameter init (PyTorch-shaped tensors) + kernel weight layout.
# ----------------------------------------------------------------------------
def init_params(key, inplanes, planes, cardinality, expansion):
    P = planes * expansion
    cpg = P // cardinality
    k1, k2, k3, k4, k5, k6 = jax.random.split(key, 6)
    w1_t = jax.random.normal(k1, (P, inplanes, 1, 1), jnp.float32) * 0.1  # OIHW
    w2_t = jax.random.normal(k2, (P, cpg, 3, 3), jnp.float32) * 0.1       # grouped OIHW
    g1 = 1.0 + 0.1 * jax.random.normal(k3, (P,), jnp.float32)
    b1 = 0.1 * jax.random.normal(k4, (P,), jnp.float32)
    g2 = 1.0 + 0.1 * jax.random.normal(k5, (P,), jnp.float32)
    b2 = 0.1 * jax.random.normal(k6, (P,), jnp.float32)
    return w1_t, w2_t, g1, b1, g2, b2


def to_kernel_weights(w1_t, w2_t, cardinality):
    """w1 -> (P, C) bf16; grouped w2 -> dense im2col weight (P, 9*P) bf16."""
    P, C = w1_t.shape[0], w1_t.shape[1]
    cpg = P // cardinality
    w1_pc = w1_t[:, :, 0, 0].astype(jnp.bfloat16)                  # (P, C)
    w2_np = np.asarray(w2_t)
    w2_full = np.zeros((3, 3, P, P), np.float32)                   # [ky,kx,ci,o]
    for o in range(P):
        gi = o // cpg
        w2_full[:, :, gi * cpg:(gi + 1) * cpg, o] = np.transpose(w2_np[o], (1, 2, 0))
    # rows of the im2col contraction: k*P + ci with k = ky*3 + kx
    w2t = np.ascontiguousarray(w2_full.reshape(9 * P, P).T)        # (P, 9P)
    return w1_pc, jnp.asarray(w2t).astype(jnp.bfloat16)


# ----------------------------------------------------------------------------
# Pure-JAX reference (same semantics as the PyTorch forward, NCHW, f32).
# ----------------------------------------------------------------------------
def _bn_train(x, g, b):
    m = jnp.mean(x, axis=(0, 2, 3), keepdims=True)
    v = jnp.mean((x - m) ** 2, axis=(0, 2, 3), keepdims=True)
    return (x - m) * lax.rsqrt(v + EPS) * g[None, :, None, None] + b[None, :, None, None]


def reference_forward(x_nchw, w1_t, w2_t, g1, b1, g2, b2, cardinality):
    out = lax.conv_general_dilated(x_nchw, w1_t, (1, 1), 'VALID',
                                   dimension_numbers=('NCHW', 'OIHW', 'NCHW'))
    out = jnp.maximum(_bn_train(out, g1, b1), 0.0)
    out = lax.conv_general_dilated(out, w2_t, (1, 1), ((1, 1), (1, 1)),
                                   dimension_numbers=('NCHW', 'OIHW', 'NCHW'),
                                   feature_group_count=cardinality)
    out = _bn_train(out, g2, b2)
    return jnp.maximum(out + x_nchw, 0.0)


# ----------------------------------------------------------------------------
if __name__ == "__main__":
    # Small config consistent with the module: stride=1, downsample=None,
    # so the identity residual requires inplanes == planes * expansion.
    N, H, W = 2, 16, 16
    inplanes, planes, cardinality, expansion = 32, 32, 4, 1
    P = planes * expansion
    assert inplanes == P
    # TODO(synk): stride > 1 / downsample path not implemented (not exercised
    # by the default constructor arguments); conv3/bn3 omitted (unused in forward).

    key = jax.random.PRNGKey(0)
    kx, kp = jax.random.split(key)
    x_nchw = jax.random.normal(kx, (N, inplanes, H, W), jnp.float32)
    w1_t, w2_t, g1, b1, g2, b2 = init_params(kp, inplanes, planes,
                                             cardinality, expansion)
    w1_pc, w2t = to_kernel_weights(w1_t, w2_t, cardinality)

    out_nchw = resnext_block_forward(x_nchw, w1_pc, w2t, g1, b1, g2, b2)
    out_nchw = jax.block_until_ready(out_nchw)

    # Reference consumes the same bf16-quantized input the kernel sees.
    x_ref_in = x_nchw.astype(jnp.bfloat16).astype(jnp.float32)
    ref_nchw = reference_forward(x_ref_in, w1_t, w2_t, g1, b1, g2, b2, cardinality)
    # bf16 MXU operands + bf16 HBM activations (f32 BN / residual) -> loose tol.
    np.testing.assert_allclose(np.asarray(out_nchw), np.asarray(ref_nchw),
                               rtol=5e-2, atol=5e-2)
    print("KERNEL_OK")
</pallas_src>

<mosaic_0001>
module attributes {stable_mosaic.version = 11 : i64} {
  func.func @_conv1_kernel(%arg0: i32, %arg1: memref<32x256xbf16, #tpu.memory_space<vmem>>, %arg2: memref<32x32xbf16, #tpu.memory_space<vmem>>, %arg3: memref<32x256xbf16, #tpu.memory_space<vmem>>, %arg4: memref<1x32x2xf32, #tpu.memory_space<vmem>>) attributes {dimension_semantics = [#tpu.dimension_semantics<parallel>], iteration_bounds = array<i64: 2>, scalar_prefetch = 0 : i64, scratch_operands = 0 : i64, tpu.core_type = #tpu.core_type<tc>, window_params = [{transform_indices = @transform_0, window_bounds = array<i64: 32, 256>}, {pipeline_mode = #tpu.pipeline_mode<synchronous>, transform_indices = @transform_1, window_bounds = array<i64: 32, 32>}, {transform_indices = @transform_2, window_bounds = array<i64: 32, 256>}, {transform_indices = @transform_3, window_bounds = array<i64: 1, 32, 2>}]} {
    %c0 = arith.constant 0 : index
    %c0_0 = arith.constant 0 : index
    %0 = vector.load %arg2[%c0, %c0_0] : memref<32x32xbf16, #tpu.memory_space<vmem>>, vector<32x32xbf16>
    %c0_1 = arith.constant 0 : index
    %c0_2 = arith.constant 0 : index
    %1 = vector.load %arg1[%c0_1, %c0_2] : memref<32x256xbf16, #tpu.memory_space<vmem>>, vector<32x256xbf16>
    %cst = arith.constant dense<0.000000e+00> : vector<32x256xf32>
    %2 = tpu.matmul %0, %1, %cst {dimension_numbers = #tpu.dot_dimension_numbers<[1], [0], [0], [1], [0, 0, 1, 1], [], []>} : vector<32x32xbf16>, vector<32x256xbf16>, vector<32x256xf32> -> vector<32x256xf32>
    %3 = arith.truncf %2 : vector<32x256xf32> to vector<32x256xbf16>
    %c0_3 = arith.constant 0 : index
    %c0_4 = arith.constant 0 : index
    %4 = vector.load %arg3[%c0_3, %c0_4] : memref<32x256xbf16, #tpu.memory_space<vmem>>, vector<32x256xbf16>
    tpu.vector_store %arg3[%c0_3, %c0_4], %3 {strides = array<i32>} : memref<32x256xbf16, #tpu.memory_space<vmem>>, vector<32x256xbf16>,
    %cst_5 = arith.constant dense<0.000000e+00> : vector<32xf32>
    %5 = vector.multi_reduction <add>, %2, %cst_5 [1] : vector<32x256xf32> to vector<32xf32>
    %6 = vector.shape_cast %5 : vector<32xf32> to vector<32x1xf32>
    %7 = arith.mulf %2, %2 : vector<32x256xf32>
    %cst_6 = arith.constant dense<0.000000e+00> : vector<32xf32>
    %8 = vector.multi_reduction <add>, %7, %cst_6 [1] : vector<32x256xf32> to vector<32xf32>
    %9 = vector.shape_cast %8 : vector<32xf32> to vector<32x1xf32>
    %10 = tpu.concatenate %6, %9 in 1 : vector<32x1xf32>, vector<32x1xf32> -> vector<32x2xf32>
    %11 = vector.shape_cast %10 : vector<32x2xf32> to vector<1x32x2xf32>
    %c0_7 = arith.constant 0 : index
    %c0_8 = arith.constant 0 : index
    %c0_9 = arith.constant 0 : index
    %12 = vector.load %arg4[%c0_7, %c0_8, %c0_9] : memref<1x32x2xf32, #tpu.memory_space<vmem>>, vector<1x32x2xf32>
    tpu.vector_store %arg4[%c0_7, %c0_8, %c0_9], %11 {strides = array<i32>} : memref<1x32x2xf32, #tpu.memory_space<vmem>>, vector<1x32x2xf32>,
    return
  }
  func.func @transform_0(%arg0: i32) -> (i32, i32) {
    %c0_i32 = arith.constant 0 : i32
    %c0_i32_0 = arith.constant 0 : i32
    return %c0_i32, %arg0 : i32, i32
  }
  func.func @transform_1(%arg0: i32) -> (i32, i32) {
    %c0_i32 = arith.constant 0 : i32
    %c0_i32_0 = arith.constant 0 : i32
    %c0_i32_1 = arith.constant 0 : i32
    return %c0_i32, %c0_i32_0 : i32, i32
  }
  func.func @transform_2(%arg0: i32) -> (i32, i32) {
    %c0_i32 = arith.constant 0 : i32
    %c0_i32_0 = arith.constant 0 : i32
    return %c0_i32, %arg0 : i32, i32
  }
  func.func @transform_3(%arg0: i32) -> (i32, i32, i32) {
    %c0_i32 = arith.constant 0 : i32
    %c0_i32_0 = arith.constant 0 : i32
    %c0_i32_1 = arith.constant 0 : i32
    return %arg0, %c0_i32, %c0_i32_0 : i32, i32, i32
  }
}

</mosaic_0001>

<llo_original>
// kernel: tpu_custom_call.1
$region0: #{tpu_custom_call.1}
  #allocation0 [shape = 'u32[]', space=smem, size = 0x4, offset = 0x4, fixed_abs, tag = 'smem constant byte address 0x4 - core index']
  #allocation1 [shape = 'u32[144,128]{1,0:T(1,128)}', space=vmem, size = 0x12000, scoped, tag = 'internal scratch']
  %s0 = inlined_call_operand.hbm [shape: bf16[32,512], index: 0, kind: input, shape index: {}]
  %s1 = inlined_call_operand.hbm [shape: bf16[32,32], index: 1, kind: input, shape index: {}]
  %s2 = inlined_call_operand.hbm [shape: bf16[32,512], index: 2, kind: output, shape index: {0}]
  %s3 = inlined_call_operand.vmem [shape: f32[2,32,2], index: 3, kind: output, shape index: {1}]
  %4 = xla_tuple %s2, %s3
  %s5 = sld [smem:[#allocation0]]
  $region57: #{tpu_custom_call.1} parent=0
    _
  %s7 = ssub.s32 1, %s5
  %s8 = scalar_select 0, %s7, %s5
  $region1: #{tpu_custom_call.1} parent=0
    #allocation2 [shape = 'u8[32768]{0}', space=vmem, size = 0x8000, scoped, tag = 'input window, operand 0']
    #allocation3 [shape = 's32[2]{0}', space=sflag, size = 0x8, scoped, tag = 'scoped memory for tpu_custom_call.1']
    #allocation4 [shape = 's32[2]{0}', space=sflag, size = 0x8, scoped, tag = 'scoped memory for tpu_custom_call.1']
    #allocation5 [shape = 'u8[8192]{0}', space=vmem, size = 0x2000, scoped, tag = 'input window, operand 1, single buffered']
    #allocation6 [shape = 's32[1]{0}', space=sflag, size = 0x4, scoped, tag = 'scoped memory for tpu_custom_call.1']
    #allocation7 [shape = 'u8[32768]{0}', space=vmem, size = 0x8000, scoped, tag = 'output window, operand 0']
    %9 = vsyncpa [#allocation3], 0
    %s10 = scalar_lea.sflag [#allocation3], 1
    %11 = vsyncpa %s10, 0
    %12 = vsyncpa [#allocation6], 0
    %13 = vsyncpa [#allocation4], 0
    %s14 = scalar_lea.sflag [#allocation4], 1
    %15 = vsyncpa %s14, 0
    loop: start=0, step=1, limit=4
    $region2: #{tpu_custom_call.1} parent=1 // loop_pre_header
      _
    $region3: #{tpu_custom_call.1} parent=1 // loop_header
      %s17 = sphi 0, %s21
      %p18 = scmp.ge.s32.totalorder %s17, 4
      %s27 = sphi 0, %s29
      %s30 = sphi 0, %s27
      %s31 = sphi 0, %s30
      %s47 = sphi 0, %s31
      %s51 = sphi 0, %s51
      %s53 = sphi 0, %s51
      %s54 = sphi 0, %s53
      %s68 = sphi 0, %s54
      %s74 = sphi 0, %s76
      %s77 = sphi 0, %s74
      %s78 = sphi 0, %s77
      %s94 = sphi 0, %s78
      %s100 = sphi 0, %s102
      %s103 = sphi 0, %s100
      %s104 = sphi 0, %s103
      %s120 = sphi 0, %s104
    $region4: #{tpu_custom_call.1} parent=1 // loop_header_branch
      %20 = sbr.rel (%p18) target = $region8
    $region5: #{tpu_custom_call.1} parent=1 // loop_body
      %s22 = ssub.s32 %s17, 1
      %s23 = ssub.s32 %s17, 2
      %s24 = sadd.s32 %s17, 1
      %s25 = ssub.s32 %s17, %s24
      %p26 = scmp.eq.s32.totalorder %s25, 0
      %s28 = sadd.s32 %s27, 1
      %s29 = scalar_select %p26, %s27, %s28
      %p32 = pneg %p26
      %p33 = scmp.eq.s32.totalorder %s17, 1
      %p34 = por %p32, %p33
      %p35 = scmp.ne.s32.totalorder %s27, %s30
      %p36 = scmp.eq.s32.totalorder %s17, 0
      %p37 = por %p35, %p36
      %p38 = scmp.ne.s32.totalorder %s27, %s30
      %p39 = scmp.eq.s32.totalorder %s22, 1
      %p40 = por %p38, %p39
      %p41 = scmp.ne.s32.totalorder %s30, %s31
      %p42 = scmp.eq.s32.totalorder %s22, 0
      %p43 = por %p41, %p42
      %p44 = scmp.ne.s32.totalorder %s30, %s31
      %p45 = scmp.eq.s32.totalorder %s23, 1
      %p46 = por %p44, %p45
      %p48 = scmp.ne.s32.totalorder %s31, %s47
      %p49 = scmp.eq.s32.totalorder %s23, 0
      %p50 = por %p48, %p49
      %s52 = sadd.s32 %s51, 1
      %p55 = scmp.eq.s32.totalorder %s17, 1
      %p56 = scmp.ne.s32.totalorder %s51, %s53
      %p57 = scmp.eq.s32.totalorder %s17, 0
      %p58 = por %p56, %p57
      %p59 = scmp.ne.s32.totalorder %s51, %s53
      %p60 = scmp.eq.s32.totalorder %s22, 1
      %p61 = por %p59, %p60
      %p62 = scmp.ne.s32.totalorder %s53, %s54
      %p63 = scmp.eq.s32.totalorder %s22, 0
      %p64 = por %p62, %p63
      %p65 = scmp.ne.s32.totalorder %s53, %s54
      %p66 = scmp.eq.s32.totalorder %s23, 1
      %p67 = por %p65, %p66
      %p69 = scmp.ne.s32.totalorder %s54, %s68
      %p70 = scmp.eq.s32.totalorder %s23, 0
      %p71 = por %p69, %p70
      %s72 = ssub.s32 %s17, %s24
      %p73 = scmp.eq.s32.totalorder %s72, 0
      %s75 = sadd.s32 %s74, 1
      %s76 = scalar_select %p73, %s74, %s75
      %p79 = pneg %p73
      %p80 = scmp.eq.s32.totalorder %s17, 1
      %p81 = por %p79, %p80
      %p82 = scmp.ne.s32.totalorder %s74, %s77
      %p83 = scmp.eq.s32.totalorder %s17, 0
      %p84 = por %p82, %p83
      %p85 = scmp.ne.s32.totalorder %s74, %s77
      %p86 = scmp.eq.s32.totalorder %s22, 1
      %p87 = por %p85, %p86
      %p88 = scmp.ne.s32.totalorder %s77, %s78
      %p89 = scmp.eq.s32.totalorder %s22, 0
      %p90 = por %p88, %p89
      %p91 = scmp.ne.s32.totalorder %s77, %s78
      %p92 = scmp.eq.s32.totalorder %s23, 1
      %p93 = por %p91, %p92
      %p95 = scmp.ne.s32.totalorder %s78, %s94
      %p96 = scmp.eq.s32.totalorder %s23, 0
      %p97 = por %p95, %p96
      %s98 = ssub.s32 %s17, %s24
      %p99 = scmp.eq.s32.totalorder %s98, 0
      %s101 = sadd.s32 %s100, 1
      %s102 = scalar_select %p99, %s100, %s101
      %p105 = pneg %p99
      %p106 = scmp.eq.s32.totalorder %s17, 1
      %p107 = por %p105, %p106
      %p108 = scmp.ne.s32.totalorder %s100, %s103
      %p109 = scmp.eq.s32.totalorder %s17, 0
      %p110 = por %p108, %p109
      %p111 = scmp.ne.s32.totalorder %s100, %s103
      %p112 = scmp.eq.s32.totalorder %s22, 1
      %p113 = por %p111, %p112
      %p114 = scmp.ne.s32.totalorder %s103, %s104
      %p115 = scmp.eq.s32.totalorder %s22, 0
      %p116 = por %p114, %p115
      %p117 = scmp.ne.s32.totalorder %s103, %s104
      %p118 = scmp.eq.s32.totalorder %s23, 1
      %p119 = por %p117, %p118
      %p121 = scmp.ne.s32.totalorder %s104, %s120
      %p122 = scmp.eq.s32.totalorder %s23, 0
      %p123 = por %p121, %p122
      %p124 = scmp.le.s32.totalorder 1, %s17
      %p125 = scmp.lt.s32.totalorder %s17, 3
      %p126 = pnand %p124, %p125
      %p127 = pneg %p126
      // Predicated region
      $region9: #{tpu_custom_call.1} parent=5 // pred_check
        _
      $region10: #{tpu_custom_call.1} parent=5 // pred_check_branch
        %129 = sbr.rel (%p126) target = $region12
      $region11: #{tpu_custom_call.1} parent=5 // pred_region
        %s130 = ssub.s32 %s17, 1
        // Predicated region
        $region13: #{tpu_custom_call.1} parent=11 // pred_check
          %p131 = pneg %p64
        $region14: #{tpu_custom_call.1} parent=11 // pred_check_branch
          %133 = sbr.rel (%p131) target = $region16
        $region15: #{tpu_custom_call.1} parent=11 // pred_region
          %s135 = ssub.s32 256, 256
          %136 = vsyncadd [#allocation6], %s135
          %s137 = sshll.u32 [#allocation5], 4
          %s138 = int_to_ptr.vmem [resolvable:$true] %s137
          %143 = dma.hbm_to_vmem [thread:$0]  %s1, 256, %s138, [#allocation6], 64, 64, 4
        $region16: #{tpu_custom_call.1} parent=11 // pred_fallthru
          _
      $region12: #{tpu_custom_call.1} parent=5 // pred_fallthru
        _
      %p144 = scmp.lt.s32.totalorder %s17, 2
      // Predicated region
      $region17: #{tpu_custom_call.1} parent=5 // pred_check
        %p145 = pneg %p144
      $region18: #{tpu_custom_call.1} parent=5 // pred_check_branch
        %147 = sbr.rel (%p145) target = $region20
      $region19: #{tpu_custom_call.1} parent=5 // pred_region
        // Predicated region
        $region21: #{tpu_custom_call.1} parent=19 // pred_check
          %p148 = pneg %p37
        $region22: #{tpu_custom_call.1} parent=19 // pred_check_branch
          %150 = sbr.rel (%p148) target = $region24
        $region23: #{tpu_custom_call.1} parent=19 // pred_region
          %s151 = sand.u32 %s27, 1
          %s152 = scalar_lea.sflag [#allocation3], %s151
          %s153 = sand.u32 %s27, 1
          %s154 = smul.addr %s153, 32
          %s155 = scalar_lea.vmem [#allocation2], %s154
          %s156 = smul.u32 2, %s17
          %s158 = ssub.s32 512, 512
          %159 = vsyncadd %s152, %s158
          %s160 = smul.addr %s156, 64
          %s161 = scalar_lea.hbm %s0, %s160
          %s162 = sshll.u32 %s155, 4
          %s163 = int_to_ptr.vmem [resolvable:$true] %s162
          %168 = dma.hbm_to_vmem [thread:$0]  %s161, 512, %s163, %s152, 256, 128, 8
        $region24: #{tpu_custom_call.1} parent=19 // pred_fallthru
          _
      $region20: #{tpu_custom_call.1} parent=5 // pred_fallthru
        _
      %p169 = scmp.le.s32.totalorder 1, %s17
      %p170 = scmp.lt.s32.totalorder %s17, 3
      %p171 = pnand %p169, %p170
      %p172 = pneg %p171
      // Predicated region
      $region25: #{tpu_custom_call.1} parent=5 // pred_check
        _
      $region26: #{tpu_custom_call.1} parent=5 // pred_check_branch
        %174 = sbr.rel (%p171) target = $region28
      $region27: #{tpu_custom_call.1} parent=5 // pred_region
        %s175 = ssub.s32 %s17, 1
        %s176 = sand.u32 %s30, 1
        %s177 = scalar_lea.sflag [#allocation3], %s176
        %s178 = sand.u32 %s30, 1
        %s179 = smul.addr %s178, 32
        %s180 = scalar_lea.vmem [#allocation2], %s179
        // Predicated region
        $region29: #{tpu_custom_call.1} parent=27 // pred_check
          %p181 = pneg %p43
        $region30: #{tpu_custom_call.1} parent=27 // pred_check_branch
          %183 = sbr.rel (%p181) target = $region32
        $region31: #{tpu_custom_call.1} parent=27 // pred_region
          %184 = dma.done %s177, 512
        $region32: #{tpu_custom_call.1} parent=27 // pred_fallthru
          _
        // Predicated region
        $region33: #{tpu_custom_call.1} parent=27 // pred_check
          %p185 = pneg %p64
        $region34: #{tpu_custom_call.1} parent=27 // pred_check_branch
          %187 = sbr.rel (%p185) target = $region36
        $region35: #{tpu_custom_call.1} parent=27 // pred_region
          %188 = dma.done [#allocation6], 256
        $region36: #{tpu_custom_call.1} parent=27 // pred_fallthru
          _
        %s189 = sand.u32 %s30, 1
        %s190 = scalar_lea.sflag [#allocation3], %s189
        %s191 = sand.u32 %s30, 1
        %s192 = smul.addr %s191, 32
        %s193 = scalar_lea.vmem [#allocation2], %s192
        %p194 = pneg %p43
        %p195 = pneg %p40
        %p196 = pneg %p64
        %p197 = pneg %p61
        %p198 = pneg %p90
        %p199 = pneg %p87
        %s200 = sand.u32 %s77, 1
        %s201 = scalar_lea.sflag [#allocation4], %s200
        %s202 = sand.u32 %s77, 1
        %s203 = smul.addr %s202, 32
        %s204 = scalar_lea.vmem [#allocation7], %s203
        %p205 = pneg %p116
        %p206 = pneg %p113
        %p207 = scmp.lt.s32.totalorder %s22, 1
        %s208 = scalar_select %p207, %s22, 1
        %s209 = smul.addr %s208, 4
        %s210 = smul.addr %s209, 8
        %s211 = scalar_lea.vmem %s3, %s210
        %s212 = smul.u32 2, %s22
        %s213 = smul.u32 2, %s22
        %p214 = scmp.lt.s32.totalorder %s22, 1
        %s215 = scalar_select %p214, %s22, 1
        %s216 = smul.addr %s215, 4
        %s217 = smul.addr %s216, 8
        %s218 = scalar_lea.vmem %s3, %s217
        %v220 = vld [vmem:[#allocation5] sm:$0xf]
        %v221 = vld [vmem:[#allocation5 + $0x4] sm:$0xf]
        %v222 = vld [vmem:[#allocation5 + $0x8] sm:$0xf]
        %v223 = vld [vmem:[#allocation5 + $0xc] sm:$0xf]
        %v224 = vld [vmem:[%s180] sm:$0xff]
        %v225 = vld [vmem:[%s180 + $0x8] sm:$0xff]
        %v226 = vld [vmem:[%s180 + $0x10] sm:$0xff]
        %v227 = vld [vmem:[%s180 + $0x18] sm:$0xff]
        %v232 = vunpack.c.l.b16 %v220
        %v233 = vunpack.c.l.b16 %v221
        %v234 = vunpack.c.l.b16 %v222
        %v235 = vunpack.c.l.b16 %v223
        %v236 = vpack.c.b16 %v233, %v232
        %v237 = vpack.c.b16 %v235, %v234
        %v242 = vunpack.c.l.b16 %v224
        %v243 = vunpack.c.h.b16 %v224
        %v244 = vunpack.c.l.b16 %v225
        %v245 = vunpack.c.h.b16 %v225
        %v246 = vunpack.c.l.b16 %v226
        %v247 = vunpack.c.h.b16 %v226
        %v248 = vunpack.c.l.b16 %v227
        %v249 = vunpack.c.h.b16 %v227
        %v250 = vpack.c.b16 %v244, %v242
        %v251 = vpack.c.b16 %v245, %v243
        %v252 = vpack.c.b16 %v248, %v246
        %v253 = vpack.c.b16 %v249, %v247
        %vm258 = vcmask 261120
        %v260 = vsel %vm258, %v236, 0
        %v263 = vsel %vm258, %v237, 0
        %265 = vmatprep.subr.bf16.mxu0 %v251
        %266 = vmatpush1.bf16.msra.mxu0 %v250
        %267 = vmatprep.subr.bf16.mxu0 %v253
        %268 = vmatpush1.bf16.msra.mxu0 %v252
        %269 = vmatprep.subr.bf16.mxu0 0
        %270 = vmatpush1.bf16.msra.mxu0 0
        %271 = vmatprep.subr.bf16.mxu0 0
        %272 = vmatpush1.bf16.msra.mxu0 0
        %273 = vmatprep.subr.bf16.mxu0 0
        %274 = vmatpush1.bf16.msra.mxu0 0
        %275 = vmatprep.subr.bf16.mxu0 0
        %276 = vmatpush1.bf16.msra.mxu0 0
        %277 = vmatprep.subr.bf16.mxu0 0
        %278 = vmatpush1.bf16.msra.mxu0 0
        %279 = vmatprep.subr.bf16.mxu0 0
        %280 = vmatpush1.bf16.msra.mxu0 0
        %281 = vmatprep.subr.bf16.mxu0 0
        %282 = vmatpush1.bf16.msra.mxu0 0
        %283 = vmatprep.subr.bf16.mxu0 0
        %284 = vmatpush1.bf16.msra.mxu0 0
        %285 = vmatprep.subr.bf16.mxu0 0
        %286 = vmatpush1.bf16.msra.mxu0 0
        %287 = vmatprep.subr.bf16.mxu0 0
        %288 = vmatpush1.bf16.msra.mxu0 0
        %289 = vmatprep.subr.bf16.mxu0 0
        %290 = vmatpush1.bf16.msra.mxu0 0
        %291 = vmatprep.subr.bf16.mxu0 0
        %292 = vmatpush1.bf16.msra.mxu0 0
        %293 = vmatprep.subr.bf16.mxu0 0
        %294 = vmatpush1.bf16.msra.mxu0 0
        %295 = vmatprep.subr.bf16.mxu0 0
        %296 = vmatpush1.bf16.msra.mxu0 0
        %297 = vmatprep.mubr.bf16.mxu0 0
        %298 = vmatmul.mubr.bf16.gmra.mrb[0].mxu0 %v260
        %v299 = vpop.f32.mrb[0].mxu0
        %v300 = vadd.f32 0.0, %v299
        %v301 = vpop.f32.mrb[0].mxu0
        %v302 = vadd.f32 0.0, %v301
        %v303 = vpop.f32.mrb[0].mxu0
        %v304 = vadd.f32 0.0, %v303
        %v305 = vpop.f32.mrb[0].mxu0
        %v306 = vadd.f32 0.0, %v305
        %307 = vmatprep.mubr.bf16.mxu0 0
        %308 = vmatmul.mubr.bf16.gmra.mrb[0].mxu0 %v263
        %v309 = vpop.f32.mrb[0].mxu0
        %v310 = vadd.f32 0.0, %v309
        %v311 = vpop.f32.mrb[0].mxu0
        %v312 = vadd.f32 0.0, %v311
        %v313 = vpop.f32.mrb[0].mxu0
        %v314 = vadd.f32 0.0, %v313
        %v315 = vpop.f32.mrb[0].mxu0
        %v316 = vadd.f32 0.0, %v315
        %317 = vdwg.mxu0
        %v318 = vpack.c.bf16 %v304, %v300
        %v319 = vpack.c.bf16 %v306, %v302
        %v320 = vpack.c.bf16 %v314, %v310
        %v321 = vpack.c.bf16 %v316, %v312
        %v326 = vunpack.c.l.b16 %v318
        %v327 = vunpack.c.l.b16 %v319
        %v328 = vunpack.c.h.b16 %v318
        %v329 = vunpack.c.h.b16 %v319
        %v330 = vunpack.c.l.b16 %v320
        %v331 = vunpack.c.l.b16 %v321
        %v332 = vunpack.c.h.b16 %v320
        %v333 = vunpack.c.h.b16 %v321
        %v334 = vpack.c.b16 %v327, %v326
        %v335 = vpack.c.b16 %v329, %v328
        %v336 = vpack.c.b16 %v331, %v330
        %v337 = vpack.c.b16 %v333, %v332
        %342 = vst [vmem:[%s204] sm:$0xff] %v334
        %343 = vst [vmem:[%s204 + $0x8] sm:$0xff] %v335
        %344 = vst [vmem:[%s204 + $0x10] sm:$0xff] %v336
        %345 = vst [vmem:[%s204 + $0x18] sm:$0xff] %v337
        %v346 = vadd.f32 %v300, %v302
        %347 = vadd.xlane.f32.xlu0 %v346
        %v348 = vpop.xlane.xlu0 %347
        %v349 = vadd.f32 %v304, %v306
        %350 = vadd.xlane.f32.xlu0 %v349
        %v351 = vpop.xlane.xlu0 %350
        %v352 = vadd.f32 %v310, %v312
        %353 = vadd.xlane.f32.xlu0 %v352
        %v354 = vpop.xlane.xlu0 %353
        %v355 = vadd.f32 %v314, %v316
        %356 = vadd.xlane.f32.xlu0 %v355
        %v357 = vpop.xlane.xlu0 %356
        %v358 = vmul.f32 %v300, %v300
        %v359 = vmul.f32 %v302, %v302
        %v360 = vmul.f32 %v304, %v304
        %v361 = vmul.f32 %v306, %v306
        %v362 = vmul.f32 %v310, %v310
        %v363 = vmul.f32 %v312, %v312
        %v364 = vmul.f32 %v314, %v314
        %v365 = vmul.f32 %v316, %v316
        %v366 = vadd.f32 %v358, %v359
        %367 = vadd.xlane.f32.xlu0 %v366
        %v368 = vpop.xlane.xlu0 %367
        %v369 = vadd.f32 %v360, %v361
        %370 = vadd.xlane.f32.xlu0 %v369
        %v371 = vpop.xlane.xlu0 %370
        %v372 = vadd.f32 %v362, %v363
        %373 = vadd.xlane.f32.xlu0 %v372
        %v374 = vpop.xlane.xlu0 %373
        %v375 = vadd.f32 %v364, %v365
        %376 = vadd.xlane.f32.xlu0 %v375
        %v377 = vpop.xlane.xlu0 %376
        %vm378 = vcmask 7168
        %v379 = vsel %vm378, %v348, %v368
        %v380 = vsel %vm378, %v351, %v371
        %v381 = vsel %vm378, %v354, %v374
        %v382 = vsel %vm378, %v357, %v377
        %vm383 = vcmask 15360
        %384 = vst.msk [vmem:[%s218] sm:$0xff] %vm383, %v379
        %385 = vst.msk [vmem:[%s218 + $0x8] sm:$0xff] %vm383, %v380
        %386 = vst.msk [vmem:[%s218 + $0x10] sm:$0xff] %vm383, %v381
        %387 = vst.msk [vmem:[%s218 + $0x18] sm:$0xff] %vm383, %v382
        %s388 = sand.u32 %s77, 1
        %s389 = scalar_lea.sflag [#allocation4], %s388
        %s390 = sand.u32 %s77, 1
        %s391 = smul.addr %s390, 32
        %s392 = scalar_lea.vmem [#allocation7], %s391
        %p393 = scmp.lt.s32.totalorder %s22, 1
        %s394 = scalar_select %p393, %s22, 1
        %s395 = smul.addr %s394, 4
        %s396 = smul.addr %s395, 8
        %s397 = scalar_lea.vmem %s3, %s396
        // Predicated region
        $region37: #{tpu_custom_call.1} parent=27 // pred_check
          %p398 = pneg %p87
        $region38: #{tpu_custom_call.1} parent=27 // pred_check_branch
          %400 = sbr.rel (%p398) target = $region40
        $region39: #{tpu_custom_call.1} parent=27 // pred_region
          %s401 = smul.u32 2, %s22
          %s403 = ssub.s32 512, 512
          %404 = vsyncadd %s389, %s403
          %s405 = smul.addr %s401, 64
          %s406 = scalar_lea.hbm %s2, %s405
          %s407 = sshll.u32 %s392, 4
          %s408 = int_to_ptr.vmem [resolvable:$true] %s407
          %413 = dma.vmem_to_hbm [thread:$0]  %s408, 512, %s406, %s389, 128, 256, 8
        $region40: #{tpu_custom_call.1} parent=27 // pred_fallthru
          _
        // Predicated region
        $region41: #{tpu_custom_call.1} parent=27 // pred_check
          %p414 = pneg %p113
        $region42: #{tpu_custom_call.1} parent=27 // pred_check_branch
          %416 = sbr.rel (%p414) target = $region44
        $region43: #{tpu_custom_call.1} parent=27 // pred_region
          _
        $region44: #{tpu_custom_call.1} parent=27 // pred_fallthru
          _
      $region28: #{tpu_custom_call.1} parent=5 // pred_fallthru
        _
      %p417 = scmp.le.s32.totalorder 2, %s17
      // Predicated region
      $region45: #{tpu_custom_call.1} parent=5 // pred_check
        %p418 = pneg %p417
      $region46: #{tpu_custom_call.1} parent=5 // pred_check_branch
        %420 = sbr.rel (%p418) target = $region48
      $region47: #{tpu_custom_call.1} parent=5 // pred_region
        %s421 = ssub.s32 %s17, 2
        // Predicated region
        $region49: #{tpu_custom_call.1} parent=47 // pred_check
          %p422 = pneg %p93
        $region50: #{tpu_custom_call.1} parent=47 // pred_check_branch
          %424 = sbr.rel (%p422) target = $region52
        $region51: #{tpu_custom_call.1} parent=47 // pred_region
          %s425 = sand.u32 %s78, 1
          %s426 = scalar_lea.sflag [#allocation4], %s425
          %s427 = sand.u32 %s78, 1
          %s428 = smul.addr %s427, 32
          %s429 = scalar_lea.vmem [#allocation7], %s428
          %430 = dma.done %s426, 512
        $region52: #{tpu_custom_call.1} parent=47 // pred_fallthru
          _
        // Predicated region
        $region53: #{tpu_custom_call.1} parent=47 // pred_check
          %p431 = pneg %p119
        $region54: #{tpu_custom_call.1} parent=47 // pred_check_branch
          %433 = sbr.rel (%p431) target = $region56
        $region55: #{tpu_custom_call.1} parent=47 // pred_region
          %p434 = scmp.lt.s32.totalorder %s23, 1
          %s435 = scalar_select %p434, %s23, 1
          %s436 = smul.addr %s435, 4
          %s437 = smul.addr %s436, 8
          %s438 = scalar_lea.vmem %s3, %s437
        $region56: #{tpu_custom_call.1} parent=47 // pred_fallthru
          _
      $region48: #{tpu_custom_call.1} parent=5 // pred_fallthru
        _
    $region6: #{tpu_custom_call.1} parent=1 // loop_footer
      %s21 = sadd.s32 1, %s17
    $region7: #{tpu_custom_call.1} parent=1 // loop_footer_branch
      %16 = sbr.rel target = $region3
    $region8: #{tpu_custom_call.1} parent=1 // loop_exit
      _
    %439 = vsyncpa [#allocation3], 1
    %s440 = scalar_lea.sflag [#allocation3], 1
    %441 = vsyncpa %s440, 1
    %442 = vsyncpa [#allocation6], 1
    %443 = vsyncpa [#allocation4], 1
    %s444 = scalar_lea.sflag [#allocation4], 1
    %445 = vsyncpa %s444, 1

</llo_original>
